<compile_context>
chip_gen: v5e
topology: v5e:2x2
jax: 0.10.0
libtpu: 0.0.40
codegen_flags: <defaults>
</compile_context>

<pallas_src>
import jax
import jax.numpy as jnp
from jax.experimental import pallas as pl
from jax.experimental.pallas import tpu as pltpu

_CHUNK_THRESHOLD_BYTES = 1 * 1024 * 1024  # below this, one DMA descriptor is best
_MAX_CHUNKS = 4                           # 2-4 chunks is enough to overlap HBM rd/wr


# ---------------------------------------------------------------------------
# Primary path: the genuinely free identity.
# ---------------------------------------------------------------------------
def identity(x: jax.Array) -> jax.Array:
    """Identity forward pass (y = x).  No kernel, no dispatch, no HBM traffic."""
    return x


# ---------------------------------------------------------------------------
# Copy path: fresh output buffer via direct HBM->HBM DMA (no VMEM staging).
# ---------------------------------------------------------------------------
def _make_hbm_copy_kernel(chunk_bounds):
    """Build a kernel that DMAs x_hbm -> o_hbm in `len(chunk_bounds)` chunks.

    `chunk_bounds` is a static Python list of (start, size) pairs along the
    leading axis (or a single (0, lead) pair meaning "copy the whole ref").
    """
    multi = len(chunk_bounds) > 1

    def kernel(x_hbm, o_hbm, sems):
        if not multi:
            cp = pltpu.make_async_copy(x_hbm, o_hbm, sems.at[0])
            cp.start()
            cp.wait()
        else:
            # Start every chunk DMA first (overlap), then wait on all of them.
            copies = []
            for c, (start, size) in enumerate(chunk_bounds):
                cp = pltpu.make_async_copy(
                    x_hbm.at[pl.ds(start, size)],
                    o_hbm.at[pl.ds(start, size)],
                    sems.at[c],
                )
                cp.start()
                copies.append(cp)
            for cp in copies:
                cp.wait()

    return kernel


def identity_copy(x: jax.Array, num_chunks: int | None = None) -> jax.Array:
    """Identity producing a *new* buffer: single-pass HBM->HBM DMA copy."""
    if x.size == 0:
        return x

    itemsize = jnp.dtype(x.dtype).itemsize
    total_bytes = x.size * itemsize
    lead = x.shape[0] if x.ndim >= 1 else 1

    # Choose a static chunk count: 1 for small arrays (latency-bound single
    # descriptor), up to _MAX_CHUNKS along the leading axis for big arrays.
    if num_chunks is None:
        num_chunks = min(_MAX_CHUNKS, lead) if total_bytes >= _CHUNK_THRESHOLD_BYTES else 1
    num_chunks = max(1, min(num_chunks, lead))

    if num_chunks > 1 and x.ndim >= 1:
        base, rem = divmod(lead, num_chunks)
        bounds, start = [], 0
        for c in range(num_chunks):
            size = base + (1 if c < rem else 0)
            bounds.append((start, size))
            start += size
    else:
        bounds = [(0, lead)]  # single whole-ref DMA (also covers 0-d inputs)

    kernel = _make_hbm_copy_kernel(bounds)

    return pl.pallas_call(
        kernel,
        out_shape=jax.ShapeDtypeStruct(x.shape, x.dtype),
        in_specs=[pl.BlockSpec(memory_space=pl.ANY)],   # stay in HBM, no auto-DMA
        out_specs=pl.BlockSpec(memory_space=pl.ANY),    # stay in HBM, no auto-DMA
        scratch_shapes=[pltpu.SemaphoreType.DMA((len(bounds),))],
    )(x)


if __name__ == "__main__":
    key = jax.random.PRNGKey(0)
    # Small NCHW input consistent with a conv-style calibration module.
    x = jax.random.normal(key, (2, 4, 16, 16), dtype=jnp.float32)

    # Primary path: plain pass-through (zero cost).
    y = identity(x)
    jax.block_until_ready(y)
    assert y.shape == x.shape and y.dtype == x.dtype
    assert bool(jnp.all(y == x)), "identity pass-through mismatch"

    # Copy path, f32: single HBM->HBM DMA descriptor.
    y2 = identity_copy(x)
    jax.block_until_ready(y2)
    assert y2.shape == x.shape and y2.dtype == x.dtype
    assert bool(jnp.all(y2 == x)), "HBM->HBM copy identity mismatch (f32)"

    # Copy path, bf16, forced 2-chunk DMA: exercises the multi-descriptor path.
    xb = x.astype(jnp.bfloat16)
    yb = identity_copy(xb, num_chunks=2)
    jax.block_until_ready(yb)
    assert yb.shape == xb.shape and yb.dtype == jnp.bfloat16
    assert bool(jnp.all(yb == xb)), "HBM->HBM copy identity mismatch (bf16, chunked)"

    print("KERNEL_OK")
</pallas_src>

<mosaic_0001>
module attributes {stable_mosaic.version = 11 : i64} {
  func.func @kernel(%arg0: memref<2x4x16x16xf32, #tpu.memory_space<any>>, %arg1: memref<2x4x16x16xf32, #tpu.memory_space<any>>, %arg2: memref<1x!tpu.dma_semaphore, #tpu.memory_space<semaphore_mem>>) attributes {dimension_semantics = [], scalar_prefetch = 0 : i64, scratch_operands = 1 : i64, tpu.core_type = #tpu.core_type<tc>} {
    %c0_i32 = arith.constant 0 : i32
    %0 = tpu.memref_slice %arg2[%c0_i32] : memref<1x!tpu.dma_semaphore, #tpu.memory_space<semaphore_mem>> -> memref<1x!tpu.dma_semaphore, #tpu.memory_space<semaphore_mem>>
    %1 = tpu.memref_squeeze %0 : memref<1x!tpu.dma_semaphore, #tpu.memory_space<semaphore_mem>> -> memref<!tpu.dma_semaphore, #tpu.memory_space<semaphore_mem>>
    tpu.enqueue_dma source(%arg0 : memref<2x4x16x16xf32, #tpu.memory_space<any>>) target(%arg1 : memref<2x4x16x16xf32, #tpu.memory_space<any>>) target_semaphore(%1 : memref<!tpu.dma_semaphore, #tpu.memory_space<semaphore_mem>>)
    %c0_i32_0 = arith.constant 0 : i32
    %2 = tpu.memref_slice %arg2[%c0_i32_0] : memref<1x!tpu.dma_semaphore, #tpu.memory_space<semaphore_mem>> -> memref<1x!tpu.dma_semaphore, #tpu.memory_space<semaphore_mem>>
    %3 = tpu.memref_squeeze %2 : memref<1x!tpu.dma_semaphore, #tpu.memory_space<semaphore_mem>> -> memref<!tpu.dma_semaphore, #tpu.memory_space<semaphore_mem>>
    tpu.wait_dma2 semaphore(%3 : memref<!tpu.dma_semaphore, #tpu.memory_space<semaphore_mem>>) src(%arg0 : memref<2x4x16x16xf32, #tpu.memory_space<any>>) dst(%arg1 : memref<2x4x16x16xf32, #tpu.memory_space<any>>)
    return
  }
}

</mosaic_0001>

<llo_original>
// kernel: tpu_custom_call.1
$region0: #{tpu_custom_call.1}
  #allocation0 [shape = 'u32[]', space=smem, size = 0x4, offset = 0x4, fixed_abs, tag = 'smem constant byte address 0x4 - core index']
  #allocation1 [shape = 'u32[72,128]{1,0:T(1,128)}', space=vmem, size = 0x9000, scoped, tag = 'internal scratch']
  #allocation2 [shape = 's32[1]{0}', space=sflag, size = 0x4, scoped, tag = 'scratch operand']
  #allocation3 [shape = 's32[]', space=sflag, size = 0x4, offset = 0, fixed_abs, tag = 'sflag constant byte address 0x0 - dummy sync flag']
  #allocation4 [shape = 'u32[0]{0}', space=smem, size = 0, offset = 0, fixed_abs, tag = 'smem constant byte address 0x0 - null']
  %s0 = inlined_call_operand.hbm [shape: f32[2,4,16,16], index: 0, kind: input, shape index: {}]
  %s1 = inlined_call_operand.hbm [shape: f32[2,4,16,16], index: 1, kind: output, shape index: {}]
  %s2 = sld [smem:[#allocation0]]
  $region2: #{tpu_custom_call.1} parent=0
    _
  %s4 = ssub.s32 1, %s2
  %s5 = scalar_select 0, %s4, %s2
  %s7 = sshll.u32 1, 14
  %s8 = sxor.u32 4294967295, %s7
  %s10 = sshll.u32 %s0, 4
  %s11 = int_to_ptr.hbm [resolvable:$true] %s10
  %s12 = sshll.u32 %s1, 4
  %s13 = int_to_ptr.hbm [resolvable:$true] %s12
  %16 = dma.general %s11, 2048, %s13, [#allocation2], [#allocation3], [#allocation4], 0, 0
  %s17 = smul.u32 2, 4
  %s18 = smul.u32 %s17, 16
  %s19 = smul.u32 %s18, 1
  %s20 = sshll.u32 %s19, 4
  %21 = dma.done [#allocation2], %s20
  %22 = vsyncmov [#allocation2]
  %s23 = vpop.sfrf %22
  %p24 = scmp.eq.s32.totalorder %s23, 0
  %p25 = pneg %p24
  %27 = shalt.err (%p25)

</llo_original>
